<compile_context>
chip_gen: v7x
topology: tpu7x:2x2x1
jax: 0.10.0
libtpu: 0.0.40
codegen_flags: <defaults>
</compile_context>

<pallas_src>
import functools

import jax
import jax.numpy as jnp
from jax.experimental import pallas as pl
from jax.experimental.pallas import tpu as pltpu


_ROW_MULT = 32   # covers sublane packing for f32 (8), bf16 (16), int8/bool (32)


def _bce_logits_kernel(x_ref, t_ref, p_ref, *, n_rows, tm, needs_mask):
    """One grid step: (tm, L) tile -> (8, L) f32 partial loss sum."""
    i = pl.program_id(0)

    x = x_ref[...].astype(jnp.float32)
    t = t_ref[...].astype(jnp.float32)
    # Stable form: max(x, 0) - x*t + log(1 + exp(-|x|)).
    loss = jnp.maximum(x, 0.0) - x * t + jnp.log(1.0 + jnp.exp(-jnp.abs(x)))

    def partial(v):
        # (tm, L) -> (tm//8, 8, L) is a layout-preserving sublane split, so the
        # axis-0 sum is pure VALU adds across vregs (no per-step XLU reduce).
        return jnp.sum(v.reshape(tm // 8, 8, v.shape[-1]), axis=0)

    if needs_mask:
        last = pl.num_programs(0) - 1

        @pl.when(i != last)
        def _bulk():
            p_ref[0] = partial(loss)

        @pl.when(i == last)
        def _tail():
            # Only the final block overhangs the array.  Use a select (not an
            # arithmetic zeroing) so NaN/Inf from unspecified OOB rows cannot
            # propagate into the sum.
            row = i * tm + jax.lax.broadcasted_iota(jnp.int32, loss.shape, 0)
            p_ref[0] = partial(jnp.where(row < n_rows, loss, 0.0))
    else:
        p_ref[0] = partial(loss)


def _choose_view(n, c):
    """Free lane-dense 2-D view of the (n, c) inputs, if one exists."""
    total = n * c
    for lanes in (2048, 1024, 512, 256, 128):
        if total % lanes == 0:
            return total // lanes, lanes
    return n, c      # fallback: keep (N, C); blocks still span full rows (contiguous DMA)


def _pick_row_tile(n_rows, lanes, itemsize_x, itemsize_t):
    """Bytes-based row tile: big enough to amortize per-step overhead, small
    enough for double-buffered inputs + f32 temporaries on every generation."""
    stream_budget = 16 << 20          # double-buffered (x + t) input blocks
    temp_budget = 6 << 20             # one full-block f32 elementwise temporary
    tm = min(stream_budget // (2 * lanes * (itemsize_x + itemsize_t)),
             temp_budget // (4 * lanes))
    # Never exceed the (rounded-up) number of rows; keep a packing-safe multiple.
    tm = min(tm, pl.cdiv(n_rows, _ROW_MULT) * _ROW_MULT)
    tm = max(_ROW_MULT, (tm // _ROW_MULT) * _ROW_MULT)
    return tm


def bce_with_logits_loss(x, target, *, ratio=1.0, weight=None, reduction="mean",
                         row_tile=None):
    """ratio * F.binary_cross_entropy_with_logits(x, target, reduction=reduction)."""
    if weight is not None:
        # TODO(synk): element-wise `weight` not implemented (module default is None).
        raise NotImplementedError("weight is not supported")
    if reduction not in ("mean", "sum"):
        # TODO(synk): reduction='none' (elementwise output) not implemented.
        raise NotImplementedError("only 'mean' and 'sum' reductions are supported")
    assert x.ndim == 2 and x.shape == target.shape, "expected matching 2-D (N, C) inputs"

    n, c = x.shape
    total = n * c

    # Keep narrow dtypes on the wire (the in-kernel .astype does `target.float()`).
    if target.dtype == jnp.bool_:
        target = target.astype(jnp.int8)

    r_rows, lanes = _choose_view(n, c)
    xv = x.reshape(r_rows, lanes)            # free: contiguous row-major reshape
    tv = target.reshape(r_rows, lanes)

    isx = jnp.dtype(xv.dtype).itemsize
    ist = jnp.dtype(tv.dtype).itemsize

    if row_tile is None:
        tm = _pick_row_tile(r_rows, lanes, isx, ist)
    else:
        tm = max(_ROW_MULT, (int(row_tile) // _ROW_MULT) * _ROW_MULT)
        tm = min(tm, pl.cdiv(r_rows, _ROW_MULT) * _ROW_MULT)

    n_blocks = pl.cdiv(r_rows, tm)
    needs_mask = (r_rows % tm) != 0
    scale = float(ratio) / float(total) if reduction == "mean" else float(ratio)

    kernel = functools.partial(_bce_logits_kernel,
                               n_rows=r_rows, tm=tm, needs_mask=needs_mask)

    block_bytes = tm * lanes * (isx + ist)
    vmem_limit = int(min(40 << 20,
                         max(16 << 20, 2 * block_bytes + 3 * 4 * tm * lanes + (2 << 20))))

    partials = pl.pallas_call(
        kernel,
        out_shape=jax.ShapeDtypeStruct((n_blocks, 8, lanes), jnp.float32),
        grid_spec=pltpu.PrefetchScalarGridSpec(
            num_scalar_prefetch=0,
            grid=(n_blocks,),
            in_specs=[
                pl.BlockSpec((tm, lanes), lambda i: (i, 0)),
                pl.BlockSpec((tm, lanes), lambda i: (i, 0)),
            ],
            out_specs=pl.BlockSpec((1, 8, lanes), lambda i: (i, 0, 0)),
        ),
        compiler_params=pltpu.CompilerParams(
            dimension_semantics=("parallel",),     # no carried state -> megacore-friendly
            vmem_limit_bytes=vmem_limit,
        ),
        cost_estimate=pl.CostEstimate(
            flops=8 * total,
            transcendentals=2 * total,
            bytes_accessed=total * (isx + ist) + n_blocks * 8 * lanes * 4,
        ),
    )(xv, tv)

    # Tiny final reduction (n_blocks * 8 * lanes f32) and scaling in plain JAX.
    return jnp.sum(partials) * scale


class BCEWithLogitsLoss:
    """Mirror of the PyTorch module's constructor / forward."""

    def __init__(self, ratio=1.0, weight=None, size_average=None, reduce=None,
                 reduction="mean"):
        del size_average, reduce                     # legacy args, superseded by `reduction`
        self.ratio, self.weight, self.reduction = ratio, weight, reduction

    def __call__(self, input, target):
        return bce_with_logits_loss(input, target, ratio=self.ratio,
                                     weight=self.weight, reduction=self.reduction)


def bce_with_logits_ref(x, target, *, ratio=1.0, reduction="mean"):
    """Pure-JAX reference matching the PyTorch forward exactly."""
    xf = x.astype(jnp.float32)
    tf = target.astype(jnp.float32)
    loss = jnp.maximum(xf, 0.0) - xf * tf + jnp.log1p(jnp.exp(-jnp.abs(xf)))
    if reduction == "mean":
        red = jnp.mean(loss)
    elif reduction == "sum":
        red = jnp.sum(loss)
    else:
        red = loss
    return ratio * red


if __name__ == "__main__":
    key = jax.random.PRNGKey(0)
    k1, k2, k3, k4, k5, k6 = jax.random.split(key, 6)

    cases = []

    # (1) f32 logits / f32 targets, 'mean': lane-dense repack (1280 -> (5, 256)),
    #     single block with a masked tail.
    x1 = jax.random.normal(k1, (10, 128), dtype=jnp.float32) * 3.0
    t1 = (jax.random.uniform(k2, (10, 128)) > 0.5).astype(jnp.float32)
    cases.append(dict(x=x1, t=t1, ratio=0.5, reduction="mean", row_tile=None))

    # (2) bf16 logits / bool targets, 'sum': narrow-C fallback path (6, 50).
    x2 = (jax.random.normal(k3, (6, 50), dtype=jnp.float32) * 2.0).astype(jnp.bfloat16)
    t2 = jax.random.uniform(k4, (6, 50)) > 0.5
    cases.append(dict(x=x2, t=t2, ratio=1.3, reduction="sum", row_tile=None))

    # (3) multi-block "parallel" grid with unmasked bulk blocks + masked tail
    #     (tiny row_tile override keeps the example small).
    x3 = jax.random.normal(k5, (300, 128), dtype=jnp.float32)
    t3 = (jax.random.uniform(k6, (300, 128)) > 0.5).astype(jnp.float32)
    cases.append(dict(x=x3, t=t3, ratio=1.0, reduction="mean", row_tile=32))

    for case in cases:
        mod = BCEWithLogitsLoss(ratio=case["ratio"], weight=None, size_average=None,
                                reduce=None, reduction=case["reduction"])
        out = bce_with_logits_loss(case["x"], case["t"], ratio=case["ratio"],
                                   reduction=case["reduction"], row_tile=case["row_tile"])
        out = jax.block_until_ready(out)
        ref = bce_with_logits_ref(case["x"], case["t"], ratio=case["ratio"],
                                  reduction=case["reduction"])
        assert out.shape == ref.shape
        assert jnp.allclose(out, ref, atol=1e-4, rtol=1e-4), (case["reduction"], out, ref)

    print("KERNEL_OK")
</pallas_src>

<mosaic_0001>
module attributes {stable_mosaic.version = 11 : i64} {
  func.func @_bce_logits_kernel(%arg0: i32, %arg1: memref<32x256xf32, #tpu.memory_space<vmem>>, %arg2: memref<32x256xf32, #tpu.memory_space<vmem>>, %arg3: memref<1x8x256xf32, #tpu.memory_space<vmem>>) attributes {dimension_semantics = [#tpu.dimension_semantics<parallel>], iteration_bounds = array<i64: 1>, scalar_prefetch = 0 : i64, scratch_operands = 0 : i64, tpu.core_type = #tpu.core_type<tc>, window_params = [{transform_indices = @transform_0, window_bounds = array<i64: 32, 256>}, {transform_indices = @transform_1, window_bounds = array<i64: 32, 256>}, {transform_indices = @transform_2, window_bounds = array<i64: 1, 8, 256>}]} {
    %c0 = arith.constant 0 : index
    %c0_0 = arith.constant 0 : index
    %0 = vector.load %arg1[%c0, %c0_0] : memref<32x256xf32, #tpu.memory_space<vmem>>, vector<32x256xf32>
    %c0_1 = arith.constant 0 : index
    %c0_2 = arith.constant 0 : index
    %1 = vector.load %arg2[%c0_1, %c0_2] : memref<32x256xf32, #tpu.memory_space<vmem>>, vector<32x256xf32>
    %cst = arith.constant 0.000000e+00 : f32
    %2 = vector.broadcast %cst : f32 to vector<32x256xf32>
    %3 = arith.maximumf %0, %2 : vector<32x256xf32>
    %4 = arith.mulf %0, %1 : vector<32x256xf32>
    %5 = arith.subf %3, %4 : vector<32x256xf32>
    %6 = math.absf %0 : vector<32x256xf32>
    %cst_3 = arith.constant 0.000000e+00 : f32
    %7 = vector.broadcast %cst_3 : f32 to vector<32x256xf32>
    %8 = arith.subf %7, %6 : vector<32x256xf32>
    %9 = math.exp %8 : vector<32x256xf32>
    %cst_4 = arith.constant 1.000000e+00 : f32
    %10 = vector.broadcast %cst_4 : f32 to vector<32x256xf32>
    %11 = arith.addf %10, %9 : vector<32x256xf32>
    %12 = math.log %11 : vector<32x256xf32>
    %13 = arith.addf %5, %12 : vector<32x256xf32>
    %c0_i32 = arith.constant 0 : i32
    %14 = arith.cmpi ne, %arg0, %c0_i32 : i32
    %15 = arith.extui %14 : i1 to i32
    %c0_i32_5 = arith.constant 0 : i32
    %16 = arith.cmpi ne, %15, %c0_i32_5 : i32
    scf.if %16 {
      %20 = vector.shape_cast %13 : vector<32x256xf32> to vector<4x8x256xf32>
      %cst_8 = arith.constant dense<0.000000e+00> : vector<8x256xf32>
      %21 = vector.multi_reduction <add>, %20, %cst_8 [0] : vector<4x8x256xf32> to vector<8x256xf32>
      %c0_9 = arith.constant 0 : index
      %c0_10 = arith.constant 0 : index
      %c0_11 = arith.constant 0 : index
      %22 = vector.load %arg3[%c0_9, %c0_10, %c0_11] : memref<1x8x256xf32, #tpu.memory_space<vmem>>, vector<1x8x256xf32>
      %23 = vector.shape_cast %22 : vector<1x8x256xf32> to vector<8x256xf32>
      %24 = vector.shape_cast %21 : vector<8x256xf32> to vector<1x8x256xf32>
      tpu.vector_store %arg3[%c0_9, %c0_10, %c0_11], %24 {strides = array<i32>} : memref<1x8x256xf32, #tpu.memory_space<vmem>>, vector<1x8x256xf32>,
    } else {
    }
    %c0_i32_6 = arith.constant 0 : i32
    %17 = arith.cmpi eq, %arg0, %c0_i32_6 : i32
    %18 = arith.extui %17 : i1 to i32
    %c0_i32_7 = arith.constant 0 : i32
    %19 = arith.cmpi ne, %18, %c0_i32_7 : i32
    scf.if %19 {
      %c32_i32 = arith.constant 32 : i32
      %20 = arith.muli %arg0, %c32_i32 : i32
      %21 = tpu.iota {dimensions = array<i32: 0>} : vector<32x256xi32>
      %22 = vector.broadcast %20 : i32 to vector<32x256xi32>
      %23 = arith.addi %22, %21 : vector<32x256xi32>
      %c5_i32 = arith.constant 5 : i32
      %24 = vector.broadcast %c5_i32 : i32 to vector<32x256xi32>
      %25 = arith.cmpi slt, %23, %24 : vector<32x256xi32>
      %cst_8 = arith.constant 0.000000e+00 : f32
      %26 = vector.broadcast %cst_8 : f32 to vector<32x256xf32>
      %27 = arith.select %25, %13, %26 : vector<32x256xi1>, vector<32x256xf32>
      %28 = vector.shape_cast %27 : vector<32x256xf32> to vector<4x8x256xf32>
      %cst_9 = arith.constant dense<0.000000e+00> : vector<8x256xf32>
      %29 = vector.multi_reduction <add>, %28, %cst_9 [0] : vector<4x8x256xf32> to vector<8x256xf32>
      %c0_10 = arith.constant 0 : index
      %c0_11 = arith.constant 0 : index
      %c0_12 = arith.constant 0 : index
      %30 = vector.load %arg3[%c0_10, %c0_11, %c0_12] : memref<1x8x256xf32, #tpu.memory_space<vmem>>, vector<1x8x256xf32>
      %31 = vector.shape_cast %30 : vector<1x8x256xf32> to vector<8x256xf32>
      %32 = vector.shape_cast %29 : vector<8x256xf32> to vector<1x8x256xf32>
      tpu.vector_store %arg3[%c0_10, %c0_11, %c0_12], %32 {strides = array<i32>} : memref<1x8x256xf32, #tpu.memory_space<vmem>>, vector<1x8x256xf32>,
    } else {
    }
    return
  }
  func.func @transform_0(%arg0: i32) -> (i32, i32) {
    %c0_i32 = arith.constant 0 : i32
    %c0_i32_0 = arith.constant 0 : i32
    return %arg0, %c0_i32 : i32, i32
  }
  func.func @transform_1(%arg0: i32) -> (i32, i32) {
    %c0_i32 = arith.constant 0 : i32
    %c0_i32_0 = arith.constant 0 : i32
    return %arg0, %c0_i32 : i32, i32
  }
  func.func @transform_2(%arg0: i32) -> (i32, i32, i32) {
    %c0_i32 = arith.constant 0 : i32
    %c0_i32_0 = arith.constant 0 : i32
    %c0_i32_1 = arith.constant 0 : i32
    return %arg0, %c0_i32, %c0_i32_0 : i32, i32, i32
  }
}

</mosaic_0001>

<llo_original>
// kernel: tpu_custom_call.1
$region0: #{tpu_custom_call.1}
  #allocation0 [shape = 'u32[]', space=smem, size = 0x4, offset = 0x4, fixed_abs, tag = 'smem constant byte address 0x4 - core index']
  #allocation1 [shape = 'u32[144,128]{1,0:T(1,128)}', space=vmem, size = 0x12000, scoped, tag = 'internal scratch']
  %s0 = inlined_call_operand.hbm [shape: f32[5,256], index: 0, kind: input, shape index: {}]
  %s1 = inlined_call_operand.hbm [shape: f32[5,256], index: 1, kind: input, shape index: {}]
  %s2 = inlined_call_operand.hbm [shape: f32[1,8,256], index: 2, kind: output, shape index: {}]
  %s3 = sld [smem:[#allocation0]]
  $region34: #{tpu_custom_call.1} parent=0
    _
  %s5 = ssub.s32 1, %s3
  %s6 = scalar_select 0, %s5, %s3
  $region1: #{tpu_custom_call.1} parent=0
    #allocation2 [shape = 'u8[32768]{0}', space=vmem, size = 0x8000, scoped, tag = 'input window, operand 0, single buffered']
    #allocation3 [shape = 's32[1]{0}', space=sflag, size = 0x4, scoped, tag = 'scoped memory for tpu_custom_call.1']
    #allocation4 [shape = 's32[1]{0}', space=sflag, size = 0x4, scoped, tag = 'scoped memory for tpu_custom_call.1']
    #allocation5 [shape = 'u8[32768]{0}', space=vmem, size = 0x8000, scoped, tag = 'input window, operand 1, single buffered']
    #allocation6 [shape = 's32[1]{0}', space=sflag, size = 0x4, scoped, tag = 'scoped memory for tpu_custom_call.1']
    #allocation7 [shape = 'u8[8192]{0}', space=vmem, size = 0x2000, scoped, tag = 'output window, operand 0, single buffered']
    %7 = vsyncpa [#allocation3], 0
    %8 = vsyncpa [#allocation6], 0
    %9 = vsyncpa [#allocation4], 0
    // Predicated region
    $region2: #{tpu_custom_call.1} parent=1 // pred_check
      _
    $region3: #{tpu_custom_call.1} parent=1 // pred_check_branch
      %11 = sbr.rel (0) target = $region5
    $region4: #{tpu_custom_call.1} parent=1 // pred_region
      %s13 = ssub.s32 1024, 256
      %14 = vsyncadd [#allocation3], %s13
      %s15 = sshll.u32 [#allocation2], 4
      %s16 = int_to_ptr.vmem [resolvable:$true] %s15
      %21 = dma.hbm_to_vmem [thread:$0]  %s0, 256, %s16, [#allocation3], 256, 256, 16
    $region5: #{tpu_custom_call.1} parent=1 // pred_fallthru
      _
    // Predicated region
    $region6: #{tpu_custom_call.1} parent=1 // pred_check
      _
    $region7: #{tpu_custom_call.1} parent=1 // pred_check_branch
      %23 = sbr.rel (0) target = $region9
    $region8: #{tpu_custom_call.1} parent=1 // pred_region
      %s25 = ssub.s32 1024, 256
      %26 = vsyncadd [#allocation6], %s25
      %s27 = sshll.u32 [#allocation5], 4
      %s28 = int_to_ptr.vmem [resolvable:$true] %s27
      %33 = dma.hbm_to_vmem [thread:$0]  %s1, 256, %s28, [#allocation6], 256, 256, 16
    $region9: #{tpu_custom_call.1} parent=1 // pred_fallthru
      _
    // Predicated region
    $region10: #{tpu_custom_call.1} parent=1 // pred_check
      _
    $region11: #{tpu_custom_call.1} parent=1 // pred_check_branch
      %35 = sbr.rel (0) target = $region13
    $region12: #{tpu_custom_call.1} parent=1 // pred_region
      %36 = dma.done [#allocation3], 1024
    $region13: #{tpu_custom_call.1} parent=1 // pred_fallthru
      _
    // Predicated region
    $region14: #{tpu_custom_call.1} parent=1 // pred_check
      _
    $region15: #{tpu_custom_call.1} parent=1 // pred_check_branch
      %38 = sbr.rel (0) target = $region17
    $region16: #{tpu_custom_call.1} parent=1 // pred_region
      %39 = dma.done [#allocation6], 1024
    $region17: #{tpu_custom_call.1} parent=1 // pred_fallthru
      _
    %v40 = vld [vmem:[#allocation2] sm:$0xff]
    %v41 = vld [vmem:[#allocation2 + $0x8] sm:$0xff]
    %v42 = vld [vmem:[#allocation2 + $0x10] sm:$0xff]
    %v43 = vld [vmem:[#allocation2 + $0x18] sm:$0xff]
    %v44 = vld [vmem:[#allocation2 + $0x20] sm:$0xff]
    %v45 = vld [vmem:[#allocation2 + $0x28] sm:$0xff]
    %v46 = vld [vmem:[#allocation2 + $0x30] sm:$0xff]
    %v47 = vld [vmem:[#allocation2 + $0x38] sm:$0xff]
    %v48 = vld [vmem:[#allocation5] sm:$0xff]
    %v49 = vld [vmem:[#allocation5 + $0x8] sm:$0xff]
    %v50 = vld [vmem:[#allocation5 + $0x10] sm:$0xff]
    %v51 = vld [vmem:[#allocation5 + $0x18] sm:$0xff]
    %v52 = vld [vmem:[#allocation5 + $0x20] sm:$0xff]
    %v53 = vld [vmem:[#allocation5 + $0x28] sm:$0xff]
    %v54 = vld [vmem:[#allocation5 + $0x30] sm:$0xff]
    %v55 = vld [vmem:[#allocation5 + $0x38] sm:$0xff]
    %v56 = vmax.f32 %v40, 0.0
    %v57 = vmax.f32 %v41, 0.0
    %v58 = vmax.f32 %v42, 0.0
    %v59 = vmax.f32 %v43, 0.0
    %v60 = vmax.f32 %v44, 0.0
    %v61 = vmax.f32 %v45, 0.0
    %v62 = vmax.f32 %v46, 0.0
    %v63 = vmax.f32 %v47, 0.0
    %v64 = vmul.f32 %v40, %v48
    %v65 = vmul.f32 %v41, %v49
    %v66 = vmul.f32 %v42, %v50
    %v67 = vmul.f32 %v43, %v51
    %v68 = vmul.f32 %v44, %v52
    %v69 = vmul.f32 %v45, %v53
    %v70 = vmul.f32 %v46, %v54
    %v71 = vmul.f32 %v47, %v55
    %v72 = vsub.f32 %v56, %v64
    %v73 = vsub.f32 %v57, %v65
    %v74 = vsub.f32 %v58, %v66
    %v75 = vsub.f32 %v59, %v67
    %v76 = vsub.f32 %v60, %v68
    %v77 = vsub.f32 %v61, %v69
    %v78 = vsub.f32 %v62, %v70
    %v79 = vsub.f32 %v63, %v71
    %v80 = vand.u32 2147483647, %v40
    %v81 = vand.u32 2147483647, %v41
    %v82 = vand.u32 2147483647, %v42
    %v83 = vand.u32 2147483647, %v43
    %v84 = vand.u32 2147483647, %v44
    %v85 = vand.u32 2147483647, %v45
    %v86 = vand.u32 2147483647, %v46
    %v87 = vand.u32 2147483647, %v47
    %v88 = vsub.f32 0.0, %v80
    %v89 = vsub.f32 0.0, %v81
    %v90 = vsub.f32 0.0, %v82
    %v91 = vsub.f32 0.0, %v83
    %v92 = vsub.f32 0.0, %v84
    %v93 = vsub.f32 0.0, %v85
    %v94 = vsub.f32 0.0, %v86
    %v95 = vsub.f32 0.0, %v87
    %v96 = vmul.f32 %v88, 1.442695
    %v97 = vpow.pop %v96
    %v98 = vmul.f32 %v89, 1.442695
    %v99 = vpow.pop %v98
    %v100 = vmul.f32 %v90, 1.442695
    %v101 = vpow.pop %v100
    %v102 = vmul.f32 %v91, 1.442695
    %v103 = vpow.pop %v102
    %v104 = vmul.f32 %v92, 1.442695
    %v105 = vpow.pop %v104
    %v106 = vmul.f32 %v93, 1.442695
    %v107 = vpow.pop %v106
    %v108 = vmul.f32 %v94, 1.442695
    %v109 = vpow.pop %v108
    %v110 = vmul.f32 %v95, 1.442695
    %v111 = vpow.pop %v110
    %v112 = vadd.f32 %v97, 1.0
    %v113 = vadd.f32 %v99, 1.0
    %v114 = vadd.f32 %v101, 1.0
    %v115 = vadd.f32 %v103, 1.0
    %v116 = vadd.f32 %v105, 1.0
    %v117 = vadd.f32 %v107, 1.0
    %v118 = vadd.f32 %v109, 1.0
    %v119 = vadd.f32 %v111, 1.0
    %v120 = vlog2.pop %v112
    %v121 = vmul.f32 %v120, 0.6931472
    %v122 = vlog2.pop %v113
    %v123 = vmul.f32 %v122, 0.6931472
    %v124 = vlog2.pop %v114
    %v125 = vmul.f32 %v124, 0.6931472
    %v126 = vlog2.pop %v115
    %v127 = vmul.f32 %v126, 0.6931472
    %v128 = vlog2.pop %v116
    %v129 = vmul.f32 %v128, 0.6931472
    %v130 = vlog2.pop %v117
    %v131 = vmul.f32 %v130, 0.6931472
    %v132 = vlog2.pop %v118
    %v133 = vmul.f32 %v132, 0.6931472
    %v134 = vlog2.pop %v119
    %v135 = vmul.f32 %v134, 0.6931472
    %v136 = vadd.f32 %v72, %v121
    %v137 = vadd.f32 %v73, %v123
    %v138 = vadd.f32 %v74, %v125
    %v139 = vadd.f32 %v75, %v127
    %v140 = vadd.f32 %v76, %v129
    %v141 = vadd.f32 %v77, %v131
    %v142 = vadd.f32 %v78, %v133
    %v143 = vadd.f32 %v79, %v135
    %p144 = scmp.ne.s32.totalorder 0, 0
    // Predicated region
    $region18: #{tpu_custom_call.1} parent=1 // pred_check
      %p145 = pneg %p144
    $region19: #{tpu_custom_call.1} parent=1 // pred_check_branch
      %147 = sbr.rel (%p145) target = $region21
    $region20: #{tpu_custom_call.1} parent=1 // pred_region
      %v148 = vadd.f32 %v136, %v138
      %v149 = vadd.f32 %v148, %v140
      %v150 = vadd.f32 %v149, %v142
      %v151 = vadd.f32 %v137, %v139
      %v152 = vadd.f32 %v151, %v141
      %v153 = vadd.f32 %v152, %v143
      %154 = vst [vmem:[#allocation7] sm:$0xff] %v150
      %155 = vst [vmem:[#allocation7 + $0x8] sm:$0xff] %v153
    $region21: #{tpu_custom_call.1} parent=1 // pred_fallthru
      _
    %p156 = scmp.eq.s32.totalorder 0, 0
    // Predicated region
    $region22: #{tpu_custom_call.1} parent=1 // pred_check
      %p157 = pneg %p156
    $region23: #{tpu_custom_call.1} parent=1 // pred_check_branch
      %159 = sbr.rel (%p157) target = $region25
    $region24: #{tpu_custom_call.1} parent=1 // pred_region
      %s160 = smul.u32 0, 32
      %v161 = vlaneseq
      %v162 = vshrl.u32 %v161, 7
      %v163 = vadd.s32 %v162, 8
      %v164 = vadd.s32 %v162, 16
      %v165 = vadd.s32 %v162, 24
      %v166 = vstv %s160
      %v167 = vadd.s32 %v166, %v162
      %v168 = vadd.s32 %v166, %v163
      %v169 = vadd.s32 %v166, %v164
      %v170 = vadd.s32 %v166, %v165
      %vm171 = vcmp.lt.s32.totalorder %v167, 5
      %vm172 = vcmp.lt.s32.totalorder %v168, 5
      %vm173 = vcmp.lt.s32.totalorder %v169, 5
      %vm174 = vcmp.lt.s32.totalorder %v170, 5
      %v175 = vsel %vm171, %v136, 0.0
      %v176 = vsel %vm171, %v137, 0.0
      %v177 = vsel %vm172, %v138, 0.0
      %v178 = vsel %vm172, %v139, 0.0
      %v179 = vsel %vm173, %v140, 0.0
      %v180 = vsel %vm173, %v141, 0.0
      %v181 = vsel %vm174, %v142, 0.0
      %v182 = vsel %vm174, %v143, 0.0
      %v183 = vadd.f32 %v175, %v177
      %v184 = vadd.f32 %v183, %v179
      %v185 = vadd.f32 %v184, %v181
      %v186 = vadd.f32 %v176, %v178
      %v187 = vadd.f32 %v186, %v180
      %v188 = vadd.f32 %v187, %v182
      %189 = vst [vmem:[#allocation7] sm:$0xff] %v185
      %190 = vst [vmem:[#allocation7 + $0x8] sm:$0xff] %v188
    $region25: #{tpu_custom_call.1} parent=1 // pred_fallthru
      _
    // Predicated region
    $region26: #{tpu_custom_call.1} parent=1 // pred_check
      _
    $region27: #{tpu_custom_call.1} parent=1 // pred_check_branch
      %192 = sbr.rel (0) target = $region29
    $region28: #{tpu_custom_call.1} parent=1 // pred_region
      %s194 = ssub.s32 256, 256
      %195 = vsyncadd [#allocation4], %s194
      %s197 = sshll.u32 [#allocation7], 4
      %s198 = int_to_ptr.vmem [resolvable:$true] %s197
      %200 = dma.vmem_to_hbm [thread:$0]  %s198, 256, %s2, [#allocation4]
    $region29: #{tpu_custom_call.1} parent=1 // pred_fallthru
      _
    // Predicated region
    $region30: #{tpu_custom_call.1} parent=1 // pred_check
      _
    $region31: #{tpu_custom_call.1} parent=1 // pred_check_branch
      %202 = sbr.rel (0) target = $region33
    $region32: #{tpu_custom_call.1} parent=1 // pred_region
      %203 = dma.done [#allocation4], 256
    $region33: #{tpu_custom_call.1} parent=1 // pred_fallthru
      _
    %204 = vsyncpa [#allocation3], 1
    %205 = vsyncpa [#allocation6], 1
    %206 = vsyncpa [#allocation4], 1

</llo_original>
